<compile_context>
chip_gen: v7x
topology: tpu7x:2x2x1
jax: 0.10.0
libtpu: 0.0.40
codegen_flags: <defaults>
</compile_context>

<pallas_src>
import functools

import jax
import jax.numpy as jnp
from jax import lax
from jax.experimental import pallas as pl
from jax.experimental.pallas import tpu as pltpu


# ----------------------------------------------------------------------------
# Fused kernel: one (batch) step = full CrossAttention forward for that batch.
# ----------------------------------------------------------------------------
def _cross_attn_kernel(x_ref, y_ref, wq_ref, wkv_ref, wp_ref,
                       qb_ref, vb_ref, pb_ref, o_ref,
                       *, num_heads, head_dim):
    f32 = jnp.float32
    bf16 = jnp.bfloat16
    ahd = num_heads * head_dim

    # Projections: bf16 operands, f32 accumulation on the MXU.
    # wq / qb are pre-scaled by `scale` in prepare_params, so q arrives scaled.
    xb = x_ref[...].astype(bf16)                                    # (N, C)
    yb = y_ref[...].astype(bf16)                                    # (N, C)
    q = jnp.dot(xb, wq_ref[...], preferred_element_type=f32) + qb_ref[...]   # (N, AHD)
    kv = jnp.dot(yb, wkv_ref[...], preferred_element_type=f32)               # (N, 2*AHD)

    k = kv[:, :ahd]                                                 # (N, AHD) (no bias)
    v = kv[:, ahd:] + vb_ref[...]                                   # (N, AHD)

    # Per-head attention (num_heads is a small static constant -> unrolled).
    # Head outputs stay in vregs and are merged with one lane-dim concat so
    # the final projection is a single big MXU matmul.
    head_outs = []
    for h in range(num_heads):
        lo, hi = h * head_dim, (h + 1) * head_dim
        qh = q[:, lo:hi].astype(bf16)                               # (N, D)
        kh = k[:, lo:hi].astype(bf16)                               # (N, D)
        vh = v[:, lo:hi].astype(bf16)                               # (N, D)

        # scores = qh @ kh^T without materializing a transpose.
        s = lax.dot_general(qh, kh, (((1,), (1,)), ((), ())),
                            preferred_element_type=f32)             # (N, N)

        # Numerically stable softmax, kept in f32 (VPU/EUP).
        s = s - jnp.max(s, axis=-1, keepdims=True)
        p = jnp.exp(s)
        p = p * pl.reciprocal(jnp.sum(p, axis=-1, keepdims=True), approx=True)

        head_outs.append(
            jnp.dot(p.astype(bf16), vh, preferred_element_type=f32))  # (N, D)

    merged = jnp.concatenate(head_outs, axis=-1).astype(bf16)       # (N, AHD)

    # Output projection on the merged (N, AHD) slab.
    out = jnp.dot(merged, wp_ref[...], preferred_element_type=f32) + pb_ref[...]  # (N, C)
    o_ref[...] = out.astype(o_ref.dtype)


# ----------------------------------------------------------------------------
# Wrappers
# ----------------------------------------------------------------------------
def prepare_params(params, scale):
    """One-time weight prep (outside the hot path): fold the qk scale into the
    q weight/bias, transpose, and cast weights to bf16."""
    ahd = params["q_w"].shape[0]
    wq_scaled = jnp.asarray(params["q_w"], jnp.float32) * scale
    qb_scaled = jnp.asarray(params["q_b"], jnp.float32) * scale
    return {
        "wq_t": wq_scaled.T.astype(jnp.bfloat16),                   # (C, AHD)
        "wkv_t": jnp.asarray(params["kv_w"], jnp.bfloat16).T,       # (C, 2*AHD)
        "wp_t": jnp.asarray(params["proj_w"], jnp.bfloat16).T,      # (AHD, C)
        "q_b": qb_scaled.reshape(1, ahd),
        "v_b": jnp.asarray(params["v_b"], jnp.float32).reshape(1, ahd),
        "proj_b": jnp.asarray(params["proj_b"], jnp.float32).reshape(1, -1),
    }


def cross_attention(x, y, prepared, num_heads):
    """Fused Pallas implementation of CrossAttention.forward(x, y)."""
    B, N, C = x.shape
    ahd = prepared["wq_t"].shape[1]
    head_dim = ahd // num_heads
    out_c = prepared["wp_t"].shape[1]

    kernel = functools.partial(
        _cross_attn_kernel, num_heads=num_heads, head_dim=head_dim)

    return pl.pallas_call(
        kernel,
        out_shape=jax.ShapeDtypeStruct((B, N, out_c), x.dtype),
        grid=(B,),
        in_specs=[
            pl.BlockSpec((None, N, C), lambda b: (b, 0, 0)),        # x
            pl.BlockSpec((None, N, C), lambda b: (b, 0, 0)),        # y
            pl.BlockSpec((C, ahd), lambda b: (0, 0)),               # wq_t (pre-scaled)
            pl.BlockSpec((C, 2 * ahd), lambda b: (0, 0)),           # wkv_t
            pl.BlockSpec((ahd, out_c), lambda b: (0, 0)),           # wp_t
            pl.BlockSpec((1, ahd), lambda b: (0, 0)),               # q_b (pre-scaled)
            pl.BlockSpec((1, ahd), lambda b: (0, 0)),               # v_b
            pl.BlockSpec((1, out_c), lambda b: (0, 0)),             # proj_b
        ],
        out_specs=pl.BlockSpec((None, N, out_c), lambda b: (b, 0, 0)),
        compiler_params=pltpu.CompilerParams(
            dimension_semantics=("parallel",)),
    )(x, y, prepared["wq_t"], prepared["wkv_t"], prepared["wp_t"],
      prepared["q_b"], prepared["v_b"], prepared["proj_b"])


# ----------------------------------------------------------------------------
# Pure-JAX f32 reference (mirrors the PyTorch forward) for a sanity check.
# ----------------------------------------------------------------------------
def cross_attention_ref(x, y, p, num_heads, scale):
    B, N, C = x.shape
    AHD = p["q_w"].shape[0]
    D = AHD // num_heads
    kv_bias = jnp.concatenate([jnp.zeros_like(p["v_b"]), p["v_b"]], axis=0)
    kv = y @ p["kv_w"].T + kv_bias
    kv = kv.reshape(B, N, 2, num_heads, D).transpose(2, 0, 3, 1, 4)
    k, v = kv[0], kv[1]
    q = (x @ p["q_w"].T + p["q_b"]).reshape(B, N, num_heads, D).transpose(0, 2, 1, 3)
    q = q * scale
    attn = jax.nn.softmax(q @ jnp.swapaxes(k, -2, -1), axis=-1)
    o = (attn @ v).transpose(0, 2, 1, 3).reshape(B, N, AHD)
    return o @ p["proj_w"].T + p["proj_b"]


# ----------------------------------------------------------------------------
if __name__ == "__main__":
    B, N, C, H = 2, 8, 32, 4        # small shapes consistent with the module
    D = C // H
    all_head_dim = D * H
    scale = float(D) ** -0.5

    key = jax.random.PRNGKey(0)
    ks = jax.random.split(key, 8)
    x = jax.random.normal(ks[0], (B, N, C), jnp.float32)
    y = jax.random.normal(ks[1], (B, N, C), jnp.float32)

    # Deterministic synthetic parameters (qkv_bias=True path).
    params = {
        "q_w": 0.05 * jax.random.normal(ks[2], (all_head_dim, C), jnp.float32),
        "kv_w": 0.05 * jax.random.normal(ks[3], (2 * all_head_dim, C), jnp.float32),
        "q_b": 0.05 * jax.random.normal(ks[4], (all_head_dim,), jnp.float32),
        "v_b": 0.05 * jax.random.normal(ks[5], (all_head_dim,), jnp.float32),
        "proj_w": 0.05 * jax.random.normal(ks[6], (C, all_head_dim), jnp.float32),
        "proj_b": 0.05 * jax.random.normal(ks[7], (C,), jnp.float32),
    }

    prepared = prepare_params(params, scale)   # scale fold + transpose + bf16, once
    out = cross_attention(x, y, prepared, H)
    out = jax.block_until_ready(out)

    ref = cross_attention_ref(x, y, params, H, scale)
    assert out.shape == (B, N, C)
    # Kernel uses bf16 MXU operands (f32 accumulation) vs. a pure f32 reference,
    # so tolerance is loosened to bf16-level relative error.
    assert jnp.allclose(out, ref, atol=2e-2, rtol=2e-2), "mismatch vs reference"

    print("KERNEL_OK")
</pallas_src>

<mosaic_0001>
module attributes {stable_mosaic.version = 11 : i64} {
  func.func @_cross_attn_kernel(%arg0: i32, %arg1: memref<1x8x32xf32, #tpu.memory_space<vmem>>, %arg2: memref<1x8x32xf32, #tpu.memory_space<vmem>>, %arg3: memref<32x32xbf16, #tpu.memory_space<vmem>>, %arg4: memref<32x64xbf16, #tpu.memory_space<vmem>>, %arg5: memref<32x32xbf16, #tpu.memory_space<vmem>>, %arg6: memref<1x32xf32, #tpu.memory_space<vmem>>, %arg7: memref<1x32xf32, #tpu.memory_space<vmem>>, %arg8: memref<1x32xf32, #tpu.memory_space<vmem>>, %arg9: memref<1x8x32xf32, #tpu.memory_space<vmem>>) attributes {dimension_semantics = [#tpu.dimension_semantics<parallel>], iteration_bounds = array<i64: 2>, scalar_prefetch = 0 : i64, scratch_operands = 0 : i64, tpu.core_type = #tpu.core_type<tc>, window_params = [{transform_indices = @transform_0, window_bounds = array<i64: 1, 8, 32>}, {transform_indices = @transform_1, window_bounds = array<i64: 1, 8, 32>}, {pipeline_mode = #tpu.pipeline_mode<synchronous>, transform_indices = @transform_2, window_bounds = array<i64: 32, 32>}, {pipeline_mode = #tpu.pipeline_mode<synchronous>, transform_indices = @transform_3, window_bounds = array<i64: 32, 64>}, {pipeline_mode = #tpu.pipeline_mode<synchronous>, transform_indices = @transform_4, window_bounds = array<i64: 32, 32>}, {pipeline_mode = #tpu.pipeline_mode<synchronous>, transform_indices = @transform_5, window_bounds = array<i64: 1, 32>}, {pipeline_mode = #tpu.pipeline_mode<synchronous>, transform_indices = @transform_6, window_bounds = array<i64: 1, 32>}, {pipeline_mode = #tpu.pipeline_mode<synchronous>, transform_indices = @transform_7, window_bounds = array<i64: 1, 32>}, {transform_indices = @transform_8, window_bounds = array<i64: 1, 8, 32>}]} {
    %c0 = arith.constant 0 : index
    %c0_0 = arith.constant 0 : index
    %c0_1 = arith.constant 0 : index
    %0 = vector.load %arg1[%c0, %c0_0, %c0_1] : memref<1x8x32xf32, #tpu.memory_space<vmem>>, vector<1x8x32xf32>
    %1 = vector.shape_cast %0 : vector<1x8x32xf32> to vector<8x32xf32>
    %2 = arith.truncf %1 : vector<8x32xf32> to vector<8x32xbf16>
    %c0_2 = arith.constant 0 : index
    %c0_3 = arith.constant 0 : index
    %c0_4 = arith.constant 0 : index
    %3 = vector.load %arg2[%c0_2, %c0_3, %c0_4] : memref<1x8x32xf32, #tpu.memory_space<vmem>>, vector<1x8x32xf32>
    %4 = vector.shape_cast %3 : vector<1x8x32xf32> to vector<8x32xf32>
    %5 = arith.truncf %4 : vector<8x32xf32> to vector<8x32xbf16>
    %c0_5 = arith.constant 0 : index
    %c0_6 = arith.constant 0 : index
    %6 = vector.load %arg3[%c0_5, %c0_6] : memref<32x32xbf16, #tpu.memory_space<vmem>>, vector<32x32xbf16>
    %cst = arith.constant dense<0.000000e+00> : vector<8x32xf32>
    %7 = tpu.matmul %2, %6, %cst {dimension_numbers = #tpu.dot_dimension_numbers<[1], [0], [0], [1], [0, 0, 1, 1], [], []>} : vector<8x32xbf16>, vector<32x32xbf16>, vector<8x32xf32> -> vector<8x32xf32>
    %c0_7 = arith.constant 0 : index
    %c0_8 = arith.constant 0 : index
    %8 = vector.load %arg6[%c0_7, %c0_8] : memref<1x32xf32, #tpu.memory_space<vmem>>, vector<1x32xf32>
    %9 = vector.broadcast %8 : vector<1x32xf32> to vector<8x32xf32>
    %10 = arith.addf %7, %9 : vector<8x32xf32>
    %c0_9 = arith.constant 0 : index
    %c0_10 = arith.constant 0 : index
    %11 = vector.load %arg4[%c0_9, %c0_10] : memref<32x64xbf16, #tpu.memory_space<vmem>>, vector<32x64xbf16>
    %cst_11 = arith.constant dense<0.000000e+00> : vector<8x64xf32>
    %12 = tpu.matmul %5, %11, %cst_11 {dimension_numbers = #tpu.dot_dimension_numbers<[1], [0], [0], [1], [0, 0, 1, 1], [], []>} : vector<8x32xbf16>, vector<32x64xbf16>, vector<8x64xf32> -> vector<8x64xf32>
    %13 = vector.extract_strided_slice %12 {offsets = [0, 0], sizes = [8, 32], strides = [1, 1]} : vector<8x64xf32> to vector<8x32xf32>
    %14 = vector.extract_strided_slice %12 {offsets = [0, 32], sizes = [8, 32], strides = [1, 1]} : vector<8x64xf32> to vector<8x32xf32>
    %c0_12 = arith.constant 0 : index
    %c0_13 = arith.constant 0 : index
    %15 = vector.load %arg7[%c0_12, %c0_13] : memref<1x32xf32, #tpu.memory_space<vmem>>, vector<1x32xf32>
    %16 = vector.broadcast %15 : vector<1x32xf32> to vector<8x32xf32>
    %17 = arith.addf %14, %16 : vector<8x32xf32>
    %18 = vector.extract_strided_slice %10 {offsets = [0, 0], sizes = [8, 8], strides = [1, 1]} : vector<8x32xf32> to vector<8x8xf32>
    %19 = arith.truncf %18 : vector<8x8xf32> to vector<8x8xbf16>
    %20 = vector.extract_strided_slice %13 {offsets = [0, 0], sizes = [8, 8], strides = [1, 1]} : vector<8x32xf32> to vector<8x8xf32>
    %21 = arith.truncf %20 : vector<8x8xf32> to vector<8x8xbf16>
    %22 = vector.extract_strided_slice %17 {offsets = [0, 0], sizes = [8, 8], strides = [1, 1]} : vector<8x32xf32> to vector<8x8xf32>
    %23 = arith.truncf %22 : vector<8x8xf32> to vector<8x8xbf16>
    %cst_14 = arith.constant dense<0.000000e+00> : vector<8x8xf32>
    %24 = tpu.matmul %19, %21, %cst_14 {dimension_numbers = #tpu.dot_dimension_numbers<[1], [1], [0], [0], [0, 0, 1, 0], [], []>} : vector<8x8xbf16>, vector<8x8xbf16>, vector<8x8xf32> -> vector<8x8xf32>
    %cst_15 = arith.constant dense<0xFF800000> : vector<8xf32>
    %25 = vector.multi_reduction <maximumf>, %24, %cst_15 [1] : vector<8x8xf32> to vector<8xf32>
    %26 = vector.shape_cast %25 : vector<8xf32> to vector<8x1xf32>
    %27 = vector.broadcast %26 : vector<8x1xf32> to vector<8x8xf32>
    %28 = arith.subf %24, %27 : vector<8x8xf32>
    %29 = math.exp %28 : vector<8x8xf32>
    %cst_16 = arith.constant dense<0.000000e+00> : vector<8xf32>
    %30 = vector.multi_reduction <add>, %29, %cst_16 [1] : vector<8x8xf32> to vector<8xf32>
    %31 = vector.shape_cast %30 : vector<8xf32> to vector<8x1xf32>
    %32 = tpu.reciprocal %31 {approx = true} : vector<8x1xf32> -> vector<8x1xf32>
    %33 = vector.broadcast %32 : vector<8x1xf32> to vector<8x8xf32>
    %34 = arith.mulf %29, %33 : vector<8x8xf32>
    %35 = arith.truncf %34 : vector<8x8xf32> to vector<8x8xbf16>
    %cst_17 = arith.constant dense<0.000000e+00> : vector<8x8xf32>
    %36 = tpu.matmul %35, %23, %cst_17 {dimension_numbers = #tpu.dot_dimension_numbers<[1], [0], [0], [1], [0, 0, 1, 1], [], []>} : vector<8x8xbf16>, vector<8x8xbf16>, vector<8x8xf32> -> vector<8x8xf32>
    %37 = vector.extract_strided_slice %10 {offsets = [0, 8], sizes = [8, 8], strides = [1, 1]} : vector<8x32xf32> to vector<8x8xf32>
    %38 = arith.truncf %37 : vector<8x8xf32> to vector<8x8xbf16>
    %39 = vector.extract_strided_slice %13 {offsets = [0, 8], sizes = [8, 8], strides = [1, 1]} : vector<8x32xf32> to vector<8x8xf32>
    %40 = arith.truncf %39 : vector<8x8xf32> to vector<8x8xbf16>
    %41 = vector.extract_strided_slice %17 {offsets = [0, 8], sizes = [8, 8], strides = [1, 1]} : vector<8x32xf32> to vector<8x8xf32>
    %42 = arith.truncf %41 : vector<8x8xf32> to vector<8x8xbf16>
    %cst_18 = arith.constant dense<0.000000e+00> : vector<8x8xf32>
    %43 = tpu.matmul %38, %40, %cst_18 {dimension_numbers = #tpu.dot_dimension_numbers<[1], [1], [0], [0], [0, 0, 1, 0], [], []>} : vector<8x8xbf16>, vector<8x8xbf16>, vector<8x8xf32> -> vector<8x8xf32>
    %cst_19 = arith.constant dense<0xFF800000> : vector<8xf32>
    %44 = vector.multi_reduction <maximumf>, %43, %cst_19 [1] : vector<8x8xf32> to vector<8xf32>
    %45 = vector.shape_cast %44 : vector<8xf32> to vector<8x1xf32>
    %46 = vector.broadcast %45 : vector<8x1xf32> to vector<8x8xf32>
    %47 = arith.subf %43, %46 : vector<8x8xf32>
    %48 = math.exp %47 : vector<8x8xf32>
    %cst_20 = arith.constant dense<0.000000e+00> : vector<8xf32>
    %49 = vector.multi_reduction <add>, %48, %cst_20 [1] : vector<8x8xf32> to vector<8xf32>
    %50 = vector.shape_cast %49 : vector<8xf32> to vector<8x1xf32>
    %51 = tpu.reciprocal %50 {approx = true} : vector<8x1xf32> -> vector<8x1xf32>
    %52 = vector.broadcast %51 : vector<8x1xf32> to vector<8x8xf32>
    %53 = arith.mulf %48, %52 : vector<8x8xf32>
    %54 = arith.truncf %53 : vector<8x8xf32> to vector<8x8xbf16>
    %cst_21 = arith.constant dense<0.000000e+00> : vector<8x8xf32>
    %55 = tpu.matmul %54, %42, %cst_21 {dimension_numbers = #tpu.dot_dimension_numbers<[1], [0], [0], [1], [0, 0, 1, 1], [], []>} : vector<8x8xbf16>, vector<8x8xbf16>, vector<8x8xf32> -> vector<8x8xf32>
    %56 = vector.extract_strided_slice %10 {offsets = [0, 16], sizes = [8, 8], strides = [1, 1]} : vector<8x32xf32> to vector<8x8xf32>
    %57 = arith.truncf %56 : vector<8x8xf32> to vector<8x8xbf16>
    %58 = vector.extract_strided_slice %13 {offsets = [0, 16], sizes = [8, 8], strides = [1, 1]} : vector<8x32xf32> to vector<8x8xf32>
    %59 = arith.truncf %58 : vector<8x8xf32> to vector<8x8xbf16>
    %60 = vector.extract_strided_slice %17 {offsets = [0, 16], sizes = [8, 8], strides = [1, 1]} : vector<8x32xf32> to vector<8x8xf32>
    %61 = arith.truncf %60 : vector<8x8xf32> to vector<8x8xbf16>
    %cst_22 = arith.constant dense<0.000000e+00> : vector<8x8xf32>
    %62 = tpu.matmul %57, %59, %cst_22 {dimension_numbers = #tpu.dot_dimension_numbers<[1], [1], [0], [0], [0, 0, 1, 0], [], []>} : vector<8x8xbf16>, vector<8x8xbf16>, vector<8x8xf32> -> vector<8x8xf32>
    %cst_23 = arith.constant dense<0xFF800000> : vector<8xf32>
    %63 = vector.multi_reduction <maximumf>, %62, %cst_23 [1] : vector<8x8xf32> to vector<8xf32>
    %64 = vector.shape_cast %63 : vector<8xf32> to vector<8x1xf32>
    %65 = vector.broadcast %64 : vector<8x1xf32> to vector<8x8xf32>
    %66 = arith.subf %62, %65 : vector<8x8xf32>
    %67 = math.exp %66 : vector<8x8xf32>
    %cst_24 = arith.constant dense<0.000000e+00> : vector<8xf32>
    %68 = vector.multi_reduction <add>, %67, %cst_24 [1] : vector<8x8xf32> to vector<8xf32>
    %69 = vector.shape_cast %68 : vector<8xf32> to vector<8x1xf32>
    %70 = tpu.reciprocal %69 {approx = true} : vector<8x1xf32> -> vector<8x1xf32>
    %71 = vector.broadcast %70 : vector<8x1xf32> to vector<8x8xf32>
    %72 = arith.mulf %67, %71 : vector<8x8xf32>
    %73 = arith.truncf %72 : vector<8x8xf32> to vector<8x8xbf16>
    %cst_25 = arith.constant dense<0.000000e+00> : vector<8x8xf32>
    %74 = tpu.matmul %73, %61, %cst_25 {dimension_numbers = #tpu.dot_dimension_numbers<[1], [0], [0], [1], [0, 0, 1, 1], [], []>} : vector<8x8xbf16>, vector<8x8xbf16>, vector<8x8xf32> -> vector<8x8xf32>
    %75 = vector.extract_strided_slice %10 {offsets = [0, 24], sizes = [8, 8], strides = [1, 1]} : vector<8x32xf32> to vector<8x8xf32>
    %76 = arith.truncf %75 : vector<8x8xf32> to vector<8x8xbf16>
    %77 = vector.extract_strided_slice %13 {offsets = [0, 24], sizes = [8, 8], strides = [1, 1]} : vector<8x32xf32> to vector<8x8xf32>
    %78 = arith.truncf %77 : vector<8x8xf32> to vector<8x8xbf16>
    %79 = vector.extract_strided_slice %17 {offsets = [0, 24], sizes = [8, 8], strides = [1, 1]} : vector<8x32xf32> to vector<8x8xf32>
    %80 = arith.truncf %79 : vector<8x8xf32> to vector<8x8xbf16>
    %cst_26 = arith.constant dense<0.000000e+00> : vector<8x8xf32>
    %81 = tpu.matmul %76, %78, %cst_26 {dimension_numbers = #tpu.dot_dimension_numbers<[1], [1], [0], [0], [0, 0, 1, 0], [], []>} : vector<8x8xbf16>, vector<8x8xbf16>, vector<8x8xf32> -> vector<8x8xf32>
    %cst_27 = arith.constant dense<0xFF800000> : vector<8xf32>
    %82 = vector.multi_reduction <maximumf>, %81, %cst_27 [1] : vector<8x8xf32> to vector<8xf32>
    %83 = vector.shape_cast %82 : vector<8xf32> to vector<8x1xf32>
    %84 = vector.broadcast %83 : vector<8x1xf32> to vector<8x8xf32>
    %85 = arith.subf %81, %84 : vector<8x8xf32>
    %86 = math.exp %85 : vector<8x8xf32>
    %cst_28 = arith.constant dense<0.000000e+00> : vector<8xf32>
    %87 = vector.multi_reduction <add>, %86, %cst_28 [1] : vector<8x8xf32> to vector<8xf32>
    %88 = vector.shape_cast %87 : vector<8xf32> to vector<8x1xf32>
    %89 = tpu.reciprocal %88 {approx = true} : vector<8x1xf32> -> vector<8x1xf32>
    %90 = vector.broadcast %89 : vector<8x1xf32> to vector<8x8xf32>
    %91 = arith.mulf %86, %90 : vector<8x8xf32>
    %92 = arith.truncf %91 : vector<8x8xf32> to vector<8x8xbf16>
    %cst_29 = arith.constant dense<0.000000e+00> : vector<8x8xf32>
    %93 = tpu.matmul %92, %80, %cst_29 {dimension_numbers = #tpu.dot_dimension_numbers<[1], [0], [0], [1], [0, 0, 1, 1], [], []>} : vector<8x8xbf16>, vector<8x8xbf16>, vector<8x8xf32> -> vector<8x8xf32>
    %94 = tpu.concatenate %36, %55, %74, %93 in 1 : vector<8x8xf32>, vector<8x8xf32>, vector<8x8xf32>, vector<8x8xf32> -> vector<8x32xf32>
    %95 = arith.truncf %94 : vector<8x32xf32> to vector<8x32xbf16>
    %c0_30 = arith.constant 0 : index
    %c0_31 = arith.constant 0 : index
    %96 = vector.load %arg5[%c0_30, %c0_31] : memref<32x32xbf16, #tpu.memory_space<vmem>>, vector<32x32xbf16>
    %cst_32 = arith.constant dense<0.000000e+00> : vector<8x32xf32>
    %97 = tpu.matmul %95, %96, %cst_32 {dimension_numbers = #tpu.dot_dimension_numbers<[1], [0], [0], [1], [0, 0, 1, 1], [], []>} : vector<8x32xbf16>, vector<32x32xbf16>, vector<8x32xf32> -> vector<8x32xf32>
    %c0_33 = arith.constant 0 : index
    %c0_34 = arith.constant 0 : index
    %98 = vector.load %arg8[%c0_33, %c0_34] : memref<1x32xf32, #tpu.memory_space<vmem>>, vector<1x32xf32>
    %99 = vector.broadcast %98 : vector<1x32xf32> to vector<8x32xf32>
    %100 = arith.addf %97, %99 : vector<8x32xf32>
    %c0_35 = arith.constant 0 : index
    %c0_36 = arith.constant 0 : index
    %c0_37 = arith.constant 0 : index
    %101 = vector.load %arg9[%c0_35, %c0_36, %c0_37] : memref<1x8x32xf32, #tpu.memory_space<vmem>>, vector<1x8x32xf32>
    %102 = vector.shape_cast %101 : vector<1x8x32xf32> to vector<8x32xf32>
    %103 = vector.shape_cast %100 : vector<8x32xf32> to vector<1x8x32xf32>
    tpu.vector_store %arg9[%c0_35, %c0_36, %c0_37], %103 {strides = array<i32>} : memref<1x8x32xf32, #tpu.memory_space<vmem>>, vector<1x8x32xf32>,
    return
  }
  func.func @transform_0(%arg0: i32) -> (i32, i32, i32) {
    %c0_i32 = arith.constant 0 : i32
    %c0_i32_0 = arith.constant 0 : i32
    %c0_i32_1 = arith.constant 0 : i32
    return %arg0, %c0_i32, %c0_i32_0 : i32, i32, i32
  }
  func.func @transform_1(%arg0: i32) -> (i32, i32, i32) {
    %c0_i32 = arith.constant 0 : i32
    %c0_i32_0 = arith.constant 0 : i32
    %c0_i32_1 = arith.constant 0 : i32
    return %arg0, %c0_i32, %c0_i32_0 : i32, i32, i32
  }
  func.func @transform_2(%arg0: i32) -> (i32, i32) {
    %c0_i32 = arith.constant 0 : i32
    %c0_i32_0 = arith.constant 0 : i32
    %c0_i32_1 = arith.constant 0 : i32
    return %c0_i32, %c0_i32_0 : i32, i32
  }
  func.func @transform_3(%arg0: i32) -> (i32, i32) {
    %c0_i32 = arith.constant 0 : i32
    %c0_i32_0 = arith.constant 0 : i32
    %c0_i32_1 = arith.constant 0 : i32
    return %c0_i32, %c0_i32_0 : i32, i32
  }
  func.func @transform_4(%arg0: i32) -> (i32, i32) {
    %c0_i32 = arith.constant 0 : i32
    %c0_i32_0 = arith.constant 0 : i32
    %c0_i32_1 = arith.constant 0 : i32
    return %c0_i32, %c0_i32_0 : i32, i32
  }
  func.func @transform_5(%arg0: i32) -> (i32, i32) {
    %c0_i32 = arith.constant 0 : i32
    %c0_i32_0 = arith.constant 0 : i32
    %c0_i32_1 = arith.constant 0 : i32
    return %c0_i32, %c0_i32_0 : i32, i32
  }
  func.func @transform_6(%arg0: i32) -> (i32, i32) {
    %c0_i32 = arith.constant 0 : i32
    %c0_i32_0 = arith.constant 0 : i32
    %c0_i32_1 = arith.constant 0 : i32
    return %c0_i32, %c0_i32_0 : i32, i32
  }
  func.func @transform_7(%arg0: i32) -> (i32, i32) {
    %c0_i32 = arith.constant 0 : i32
    %c0_i32_0 = arith.constant 0 : i32
    %c0_i32_1 = arith.constant 0 : i32
    return %c0_i32, %c0_i32_0 : i32, i32
  }
  func.func @transform_8(%arg0: i32) -> (i32, i32, i32) {
    %c0_i32 = arith.constant 0 : i32
    %c0_i32_0 = arith.constant 0 : i32
    %c0_i32_1 = arith.constant 0 : i32
    return %arg0, %c0_i32, %c0_i32_0 : i32, i32, i32
  }
}

</mosaic_0001>

<llo_original>
// kernel: tpu_custom_call.1
$region0: #{tpu_custom_call.1}
  #allocation0 [shape = 'u32[]', space=smem, size = 0x4, offset = 0x4, fixed_abs, tag = 'smem constant byte address 0x4 - core index']
  #allocation1 [shape = 'u32[144,128]{1,0:T(1,128)}', space=vmem, size = 0x12000, scoped, tag = 'internal scratch']
  %s0 = inlined_call_operand.hbm [shape: f32[2,8,32], index: 0, kind: input, shape index: {}]
  %s1 = inlined_call_operand.hbm [shape: f32[2,8,32], index: 1, kind: input, shape index: {}]
  %s2 = inlined_call_operand.hbm [shape: bf16[32,32], index: 2, kind: input, shape index: {}]
  %s3 = inlined_call_operand.hbm [shape: bf16[32,64], index: 3, kind: input, shape index: {}]
  %s4 = inlined_call_operand.hbm [shape: bf16[32,32], index: 4, kind: input, shape index: {}]
  %s5 = inlined_call_operand.vmem [shape: f32[1,32], index: 5, kind: input, shape index: {}]
  %s6 = inlined_call_operand.vmem [shape: f32[1,32], index: 6, kind: input, shape index: {}]
  %s7 = inlined_call_operand.vmem [shape: f32[1,32], index: 7, kind: input, shape index: {}]
  %s8 = inlined_call_operand.hbm [shape: f32[2,8,32], index: 8, kind: output, shape index: {}]
  %s9 = sld [smem:[#allocation0]]
  $region85: #{tpu_custom_call.1} parent=0
    _
  %s11 = ssub.s32 1, %s9
  %s12 = scalar_select 0, %s11, %s9
  $region1: #{tpu_custom_call.1} parent=0
    #allocation2 [shape = 'u8[8192]{0}', space=vmem, size = 0x2000, scoped, tag = 'input window, operand 0']
    #allocation3 [shape = 's32[2]{0}', space=sflag, size = 0x8, scoped, tag = 'scoped memory for tpu_custom_call.1']
    #allocation4 [shape = 's32[2]{0}', space=sflag, size = 0x8, scoped, tag = 'scoped memory for tpu_custom_call.1']
    #allocation5 [shape = 'u8[8192]{0}', space=vmem, size = 0x2000, scoped, tag = 'input window, operand 1']
    #allocation6 [shape = 's32[2]{0}', space=sflag, size = 0x8, scoped, tag = 'scoped memory for tpu_custom_call.1']
    #allocation7 [shape = 'u8[8192]{0}', space=vmem, size = 0x2000, scoped, tag = 'input window, operand 2, single buffered']
    #allocation8 [shape = 'u8[8192]{0}', space=vmem, size = 0x2000, scoped, tag = 'input window, operand 3, single buffered']
    #allocation9 [shape = 's32[1]{0}', space=sflag, size = 0x4, scoped, tag = 'scoped memory for tpu_custom_call.1']
    #allocation10 [shape = 'u8[8192]{0}', space=vmem, size = 0x2000, scoped, tag = 'input window, operand 4, single buffered']
    #allocation11 [shape = 'u8[8192]{0}', space=vmem, size = 0x2000, scoped, tag = 'output window, operand 0']
    %13 = vsyncpa [#allocation3], 0
    %s14 = scalar_lea.sflag [#allocation3], 1
    %15 = vsyncpa %s14, 0
    %16 = vsyncpa [#allocation6], 0
    %s17 = scalar_lea.sflag [#allocation6], 1
    %18 = vsyncpa %s17, 0
    %19 = vsyncpa [#allocation9], 0
    %20 = vsyncpa [#allocation4], 0
    %s21 = scalar_lea.sflag [#allocation4], 1
    %22 = vsyncpa %s21, 0
    loop: start=0, step=1, limit=4
    $region2: #{tpu_custom_call.1} parent=1 // loop_pre_header
      _
    $region3: #{tpu_custom_call.1} parent=1 // loop_header
      %s24 = sphi 0, %s28
      %p25 = scmp.ge.s32.totalorder %s24, 4
      %s34 = sphi 0, %s36
      %s37 = sphi 0, %s34
      %s38 = sphi 0, %s37
      %s54 = sphi 0, %s38
      %s60 = sphi 0, %s62
      %s63 = sphi 0, %s60
      %s64 = sphi 0, %s63
      %s80 = sphi 0, %s64
      %s84 = sphi 0, %s84
      %s86 = sphi 0, %s84
      %s87 = sphi 0, %s86
      %s101 = sphi 0, %s87
      %s105 = sphi 0, %s105
      %s107 = sphi 0, %s105
      %s108 = sphi 0, %s107
      %s122 = sphi 0, %s108
      %s126 = sphi 0, %s126
      %s128 = sphi 0, %s126
      %s129 = sphi 0, %s128
      %s143 = sphi 0, %s129
      %s147 = sphi 0, %s147
      %s149 = sphi 0, %s147
      %s150 = sphi 0, %s149
      %s164 = sphi 0, %s150
      %s168 = sphi 0, %s168
      %s170 = sphi 0, %s168
      %s171 = sphi 0, %s170
      %s185 = sphi 0, %s171
      %s189 = sphi 0, %s189
      %s191 = sphi 0, %s189
      %s192 = sphi 0, %s191
      %s206 = sphi 0, %s192
      %s212 = sphi 0, %s214
      %s215 = sphi 0, %s212
      %s216 = sphi 0, %s215
      %s232 = sphi 0, %s216
    $region4: #{tpu_custom_call.1} parent=1 // loop_header_branch
      %27 = sbr.rel (%p25) target = $region8
    $region5: #{tpu_custom_call.1} parent=1 // loop_body
      %s29 = ssub.s32 %s24, 1
      %s30 = ssub.s32 %s24, 2
      %s31 = sadd.s32 %s24, 1
      %s32 = ssub.s32 %s24, %s31
      %p33 = scmp.eq.s32.totalorder %s32, 0
      %s35 = sadd.s32 %s34, 1
      %s36 = scalar_select %p33, %s34, %s35
      %p39 = pneg %p33
      %p40 = scmp.eq.s32.totalorder %s24, 1
      %p41 = por %p39, %p40
      %p42 = scmp.ne.s32.totalorder %s34, %s37
      %p43 = scmp.eq.s32.totalorder %s24, 0
      %p44 = por %p42, %p43
      %p45 = scmp.ne.s32.totalorder %s34, %s37
      %p46 = scmp.eq.s32.totalorder %s29, 1
      %p47 = por %p45, %p46
      %p48 = scmp.ne.s32.totalorder %s37, %s38
      %p49 = scmp.eq.s32.totalorder %s29, 0
      %p50 = por %p48, %p49
      %p51 = scmp.ne.s32.totalorder %s37, %s38
      %p52 = scmp.eq.s32.totalorder %s30, 1
      %p53 = por %p51, %p52
      %p55 = scmp.ne.s32.totalorder %s38, %s54
      %p56 = scmp.eq.s32.totalorder %s30, 0
      %p57 = por %p55, %p56
      %s58 = ssub.s32 %s24, %s31
      %p59 = scmp.eq.s32.totalorder %s58, 0
      %s61 = sadd.s32 %s60, 1
      %s62 = scalar_select %p59, %s60, %s61
      %p65 = pneg %p59
      %p66 = scmp.eq.s32.totalorder %s24, 1
      %p67 = por %p65, %p66
      %p68 = scmp.ne.s32.totalorder %s60, %s63
      %p69 = scmp.eq.s32.totalorder %s24, 0
      %p70 = por %p68, %p69
      %p71 = scmp.ne.s32.totalorder %s60, %s63
      %p72 = scmp.eq.s32.totalorder %s29, 1
      %p73 = por %p71, %p72
      %p74 = scmp.ne.s32.totalorder %s63, %s64
      %p75 = scmp.eq.s32.totalorder %s29, 0
      %p76 = por %p74, %p75
      %p77 = scmp.ne.s32.totalorder %s63, %s64
      %p78 = scmp.eq.s32.totalorder %s30, 1
      %p79 = por %p77, %p78
      %p81 = scmp.ne.s32.totalorder %s64, %s80
      %p82 = scmp.eq.s32.totalorder %s30, 0
      %p83 = por %p81, %p82
      %s85 = sadd.s32 %s84, 1
      %p88 = scmp.eq.s32.totalorder %s24, 1
      %p89 = scmp.ne.s32.totalorder %s84, %s86
      %p90 = scmp.eq.s32.totalorder %s24, 0
      %p91 = por %p89, %p90
      %p92 = scmp.ne.s32.totalorder %s84, %s86
      %p93 = scmp.eq.s32.totalorder %s29, 1
      %p94 = por %p92, %p93
      %p95 = scmp.ne.s32.totalorder %s86, %s87
      %p96 = scmp.eq.s32.totalorder %s29, 0
      %p97 = por %p95, %p96
      %p98 = scmp.ne.s32.totalorder %s86, %s87
      %p99 = scmp.eq.s32.totalorder %s30, 1
      %p100 = por %p98, %p99
      %p102 = scmp.ne.s32.totalorder %s87, %s101
      %p103 = scmp.eq.s32.totalorder %s30, 0
      %p104 = por %p102, %p103
      %s106 = sadd.s32 %s105, 1
      %p109 = scmp.eq.s32.totalorder %s24, 1
      %p110 = scmp.ne.s32.totalorder %s105, %s107
      %p111 = scmp.eq.s32.totalorder %s24, 0
      %p112 = por %p110, %p111
      %p113 = scmp.ne.s32.totalorder %s105, %s107
      %p114 = scmp.eq.s32.totalorder %s29, 1
      %p115 = por %p113, %p114
      %p116 = scmp.ne.s32.totalorder %s107, %s108
      %p117 = scmp.eq.s32.totalorder %s29, 0
      %p118 = por %p116, %p117
      %p119 = scmp.ne.s32.totalorder %s107, %s108
      %p120 = scmp.eq.s32.totalorder %s30, 1
      %p121 = por %p119, %p120
      %p123 = scmp.ne.s32.totalorder %s108, %s122
      %p124 = scmp.eq.s32.totalorder %s30, 0
      %p125 = por %p123, %p124
      %s127 = sadd.s32 %s126, 1
      %p130 = scmp.eq.s32.totalorder %s24, 1
      %p131 = scmp.ne.s32.totalorder %s126, %s128
      %p132 = scmp.eq.s32.totalorder %s24, 0
      %p133 = por %p131, %p132
      %p134 = scmp.ne.s32.totalorder %s126, %s128
      %p135 = scmp.eq.s32.totalorder %s29, 1
      %p136 = por %p134, %p135
      %p137 = scmp.ne.s32.totalorder %s128, %s129
      %p138 = scmp.eq.s32.totalorder %s29, 0
      %p139 = por %p137, %p138
      %p140 = scmp.ne.s32.totalorder %s128, %s129
      %p141 = scmp.eq.s32.totalorder %s30, 1
      %p142 = por %p140, %p141
      %p144 = scmp.ne.s32.totalorder %s129, %s143
      %p145 = scmp.eq.s32.totalorder %s30, 0
      %p146 = por %p144, %p145
      %s148 = sadd.s32 %s147, 1
      %p151 = scmp.eq.s32.totalorder %s24, 1
      %p152 = scmp.ne.s32.totalorder %s147, %s149
      %p153 = scmp.eq.s32.totalorder %s24, 0
      %p154 = por %p152, %p153
      %p155 = scmp.ne.s32.totalorder %s147, %s149
      %p156 = scmp.eq.s32.totalorder %s29, 1
      %p157 = por %p155, %p156
      %p158 = scmp.ne.s32.totalorder %s149, %s150
      %p159 = scmp.eq.s32.totalorder %s29, 0
      %p160 = por %p158, %p159
      %p161 = scmp.ne.s32.totalorder %s149, %s150
      %p162 = scmp.eq.s32.totalorder %s30, 1
      %p163 = por %p161, %p162
      %p165 = scmp.ne.s32.totalorder %s150, %s164
      %p166 = scmp.eq.s32.totalorder %s30, 0
      %p167 = por %p165, %p166
      %s169 = sadd.s32 %s168, 1
      %p172 = scmp.eq.s32.totalorder %s24, 1
      %p173 = scmp.ne.s32.totalorder %s168, %s170
      %p174 = scmp.eq.s32.totalorder %s24, 0
      %p175 = por %p173, %p174
      %p176 = scmp.ne.s32.totalorder %s168, %s170
      %p177 = scmp.eq.s32.totalorder %s29, 1
      %p178 = por %p176, %p177
      %p179 = scmp.ne.s32.totalorder %s170, %s171
      %p180 = scmp.eq.s32.totalorder %s29, 0
      %p181 = por %p179, %p180
      %p182 = scmp.ne.s32.totalorder %s170, %s171
      %p183 = scmp.eq.s32.totalorder %s30, 1
      %p184 = por %p182, %p183
      %p186 = scmp.ne.s32.totalorder %s171, %s185
      %p187 = scmp.eq.s32.totalorder %s30, 0
      %p188 = por %p186, %p187
      %s190 = sadd.s32 %s189, 1
      %p193 = scmp.eq.s32.totalorder %s24, 1
      %p194 = scmp.ne.s32.totalorder %s189, %s191
      %p195 = scmp.eq.s32.totalorder %s24, 0
      %p196 = por %p194, %p195
      %p197 = scmp.ne.s32.totalorder %s189, %s191
      %p198 = scmp.eq.s32.totalorder %s29, 1
      %p199 = por %p197, %p198
      %p200 = scmp.ne.s32.totalorder %s191, %s192
      %p201 = scmp.eq.s32.totalorder %s29, 0
      %p202 = por %p200, %p201
      %p203 = scmp.ne.s32.totalorder %s191, %s192
      %p204 = scmp.eq.s32.totalorder %s30, 1
      %p205 = por %p203, %p204
      %p207 = scmp.ne.s32.totalorder %s192, %s206
      %p208 = scmp.eq.s32.totalorder %s30, 0
      %p209 = por %p207, %p208
      %s210 = ssub.s32 %s24, %s31
      %p211 = scmp.eq.s32.totalorder %s210, 0
      %s213 = sadd.s32 %s212, 1
      %s214 = scalar_select %p211, %s212, %s213
      %p217 = pneg %p211
      %p218 = scmp.eq.s32.totalorder %s24, 1
      %p219 = por %p217, %p218
      %p220 = scmp.ne.s32.totalorder %s212, %s215
      %p221 = scmp.eq.s32.totalorder %s24, 0
      %p222 = por %p220, %p221
      %p223 = scmp.ne.s32.totalorder %s212, %s215
      %p224 = scmp.eq.s32.totalorder %s29, 1
      %p225 = por %p223, %p224
      %p226 = scmp.ne.s32.totalorder %s215, %s216
      %p227 = scmp.eq.s32.totalorder %s29, 0
      %p228 = por %p226, %p227
      %p229 = scmp.ne.s32.totalorder %s215, %s216
      %p230 = scmp.eq.s32.totalorder %s30, 1
      %p231 = por %p229, %p230
      %p233 = scmp.ne.s32.totalorder %s216, %s232
      %p234 = scmp.eq.s32.totalorder %s30, 0
      %p235 = por %p233, %p234
      %p236 = scmp.le.s32.totalorder 1, %s24
      %p237 = scmp.lt.s32.totalorder %s24, 3
      %p238 = pnand %p236, %p237
      %p239 = pneg %p238
      // Predicated region
      $region9: #{tpu_custom_call.1} parent=5 // pred_check
        _
      $region10: #{tpu_custom_call.1} parent=5 // pred_check_branch
        %241 = sbr.rel (%p238) target = $region12
      $region11: #{tpu_custom_call.1} parent=5 // pred_region
        %s242 = ssub.s32 %s24, 1
        // Predicated region
        $region13: #{tpu_custom_call.1} parent=11 // pred_check
          %p243 = pneg %p97
        $region14: #{tpu_custom_call.1} parent=11 // pred_check_branch
          %245 = sbr.rel (%p243) target = $region16
        $region15: #{tpu_custom_call.1} parent=11 // pred_region
          %s247 = ssub.s32 256, 256
          %248 = vsyncadd [#allocation6], %s247
          %s249 = sshll.u32 [#allocation7], 4
          %s250 = int_to_ptr.vmem [resolvable:$true] %s249
          %255 = dma.hbm_to_vmem [thread:$0]  %s2, 256, %s250, [#allocation6], 64, 64, 4
        $region16: #{tpu_custom_call.1} parent=11 // pred_fallthru
          _
        // Predicated region
        $region17: #{tpu_custom_call.1} parent=11 // pred_check
          %p256 = pneg %p118
        $region18: #{tpu_custom_call.1} parent=11 // pred_check_branch
          %258 = sbr.rel (%p256) target = $region20
        $region19: #{tpu_custom_call.1} parent=11 // pred_region
          %s260 = ssub.s32 256, 256
          %261 = vsyncadd [#allocation9], %s260
          %s262 = sshll.u32 [#allocation8], 4
          %s263 = int_to_ptr.vmem [resolvable:$true] %s262
          %268 = dma.hbm_to_vmem [thread:$0]  %s3, 256, %s263, [#allocation9], 64, 64, 4
        $region20: #{tpu_custom_call.1} parent=11 // pred_fallthru
          _
        // Predicated region
        $region21: #{tpu_custom_call.1} parent=11 // pred_check
          %p269 = pneg %p139
        $region22: #{tpu_custom_call.1} parent=11 // pred_check_branch
          %271 = sbr.rel (%p269) target = $region24
        $region23: #{tpu_custom_call.1} parent=11 // pred_region
          %s273 = ssub.s32 256, 256
          %274 = vsyncadd [#allocation9], %s273
          %s275 = sshll.u32 [#allocation10], 4
          %s276 = int_to_ptr.vmem [resolvable:$true] %s275
          %281 = dma.hbm_to_vmem [thread:$0]  %s4, 256, %s276, [#allocation9], 64, 64, 4
        $region24: #{tpu_custom_call.1} parent=11 // pred_fallthru
          _
        // Predicated region
        $region25: #{tpu_custom_call.1} parent=11 // pred_check
          %p282 = pneg %p160
        $region26: #{tpu_custom_call.1} parent=11 // pred_check_branch
          %284 = sbr.rel (%p282) target = $region28
        $region27: #{tpu_custom_call.1} parent=11 // pred_region
          _
        $region28: #{tpu_custom_call.1} parent=11 // pred_fallthru
          _
        // Predicated region
        $region29: #{tpu_custom_call.1} parent=11 // pred_check
          %p285 = pneg %p181
        $region30: #{tpu_custom_call.1} parent=11 // pred_check_branch
          %287 = sbr.rel (%p285) target = $region32
        $region31: #{tpu_custom_call.1} parent=11 // pred_region
          _
        $region32: #{tpu_custom_call.1} parent=11 // pred_fallthru
          _
        // Predicated region
        $region33: #{tpu_custom_call.1} parent=11 // pred_check
          %p288 = pneg %p202
        $region34: #{tpu_custom_call.1} parent=11 // pred_check_branch
          %290 = sbr.rel (%p288) target = $region36
        $region35: #{tpu_custom_call.1} parent=11 // pred_region
          _
        $region36: #{tpu_custom_call.1} parent=11 // pred_fallthru
          _
      $region12: #{tpu_custom_call.1} parent=5 // pred_fallthru
        _
      %p291 = scmp.lt.s32.totalorder %s24, 2
      // Predicated region
      $region37: #{tpu_custom_call.1} parent=5 // pred_check
        %p292 = pneg %p291
      $region38: #{tpu_custom_call.1} parent=5 // pred_check_branch
        %294 = sbr.rel (%p292) target = $region40
      $region39: #{tpu_custom_call.1} parent=5 // pred_region
        // Predicated region
        $region41: #{tpu_custom_call.1} parent=39 // pred_check
          %p295 = pneg %p44
        $region42: #{tpu_custom_call.1} parent=39 // pred_check_branch
          %297 = sbr.rel (%p295) target = $region44
        $region43: #{tpu_custom_call.1} parent=39 // pred_region
          %s298 = sand.u32 %s34, 1
          %s299 = scalar_lea.sflag [#allocation3], %s298
          %s300 = sand.u32 %s34, 1
          %s301 = smul.addr %s300, 8
          %s302 = scalar_lea.vmem [#allocation2], %s301
          %s304 = ssub.s32 128, 128
          %305 = vsyncadd %s299, %s304
          %s306 = smul.addr %s24, 128
          %s307 = scalar_lea.hbm %s0, %s306
          %s309 = sshll.u32 %s302, 4
          %s310 = int_to_ptr.vmem [resolvable:$true] %s309
          %312 = dma.hbm_to_vmem [thread:$0]  %s307, 128, %s310, %s299
        $region44: #{tpu_custom_call.1} parent=39 // pred_fallthru
          _
        // Predicated region
        $region45: #{tpu_custom_call.1} parent=39 // pred_check
          %p313 = pneg %p70
        $region46: #{tpu_custom_call.1} parent=39 // pred_check_branch
          %315 = sbr.rel (%p313) target = $region48
        $region47: #{tpu_custom_call.1} parent=39 // pred_region
          %s316 = sand.u32 %s24, 1
          %s317 = scalar_lea.sflag [#allocation6], %s316
          %s318 = sand.u32 %s60, 1
          %s319 = smul.addr %s318, 8
          %s320 = scalar_lea.vmem [#allocation5], %s319
          %s322 = ssub.s32 128, 128
          %323 = vsyncadd %s317, %s322
          %s324 = smul.addr %s24, 128
          %s325 = scalar_lea.hbm %s1, %s324
          %s327 = sshll.u32 %s320, 4
          %s328 = int_to_ptr.vmem [resolvable:$true] %s327
          %330 = dma.hbm_to_vmem [thread:$0]  %s325, 128, %s328, %s317
        $region48: #{tpu_custom_call.1} parent=39 // pred_fallthru
          _
      $region40: #{tpu_custom_call.1} parent=5 // pred_fallthru
        _
      %p331 = scmp.le.s32.totalorder 1, %s24
      %p332 = scmp.lt.s32.totalorder %s24, 3
      %p333 = pnand %p331, %p332
      %p334 = pneg %p333
      // Predicated region
      $region49: #{tpu_custom_call.1} parent=5 // pred_check
        _
      $region50: #{tpu_custom_call.1} parent=5 // pred_check_branch
        %336 = sbr.rel (%p333) target = $region52
      $region51: #{tpu_custom_call.1} parent=5 // pred_region
        %s337 = ssub.s32 %s24, 1
        %s338 = sand.u32 %s37, 1
        %s339 = scalar_lea.sflag [#allocation3], %s338
        %s340 = sand.u32 %s37, 1
        %s341 = smul.addr %s340, 8
        %s342 = scalar_lea.vmem [#allocation2], %s341
        // Predicated region
        $region53: #{tpu_custom_call.1} parent=51 // pred_check
          %p343 = pneg %p50
        $region54: #{tpu_custom_call.1} parent=51 // pred_check_branch
          %345 = sbr.rel (%p343) target = $region56
        $region55: #{tpu_custom_call.1} parent=51 // pred_region
          %346 = dma.done %s339, 128
        $region56: #{tpu_custom_call.1} parent=51 // pred_fallthru
          _
        %s347 = sand.u32 %s29, 1
        %s348 = scalar_lea.sflag [#allocation6], %s347
        %s349 = sand.u32 %s63, 1
        %s350 = smul.addr %s349, 8
        %s351 = scalar_lea.vmem [#allocation5], %s350
        // Predicated region
        $region57: #{tpu_custom_call.1} parent=51 // pred_check
          %p352 = pneg %p76
        $region58: #{tpu_custom_call.1} parent=51 // pred_check_branch
          %354 = sbr.rel (%p352) target = $region60
        $region59: #{tpu_custom_call.1} parent=51 // pred_region
          %355 = dma.done %s348, 128
        $region60: #{tpu_custom_call.1} parent=51 // pred_fallthru
          _
        // Predicated region
        $region61: #{tpu_custom_call.1} parent=51 // pred_check
          %p356 = pneg %p97
        $region62: #{tpu_custom_call.1} parent=51 // pred_check_branch
          %358 = sbr.rel (%p356) target = $region64
        $region63: #{tpu_custom_call.1} parent=51 // pred_region
          %359 = dma.done [#allocation6], 256
        $region64: #{tpu_custom_call.1} parent=51 // pred_fallthru
          _
        // Predicated region
        $region65: #{tpu_custom_call.1} parent=51 // pred_check
          %p360 = pneg %p118
        $region66: #{tpu_custom_call.1} parent=51 // pred_check_branch
          %362 = sbr.rel (%p360) target = $region68
        $region67: #{tpu_custom_call.1} parent=51 // pred_region
          %363 = dma.done [#allocation9], 256
        $region68: #{tpu_custom_call.1} parent=51 // pred_fallthru
          _
        // Predicated region
        $region69: #{tpu_custom_call.1} parent=51 // pred_check
          %p364 = pneg %p139
        $region70: #{tpu_custom_call.1} parent=51 // pred_check_branch
          %366 = sbr.rel (%p364) target = $region72
        $region71: #{tpu_custom_call.1} parent=51 // pred_region
          %367 = dma.done [#allocation9], 256
        $region72: #{tpu_custom_call.1} parent=51 // pred_fallthru
          _
        %s368 = sand.u32 %s37, 1
        %s369 = scalar_lea.sflag [#allocation3], %s368
        %s370 = sand.u32 %s37, 1
        %s371 = smul.addr %s370, 8
        %s372 = scalar_lea.vmem [#allocation2], %s371
        %p373 = pneg %p50
        %p374 = pneg %p47
        %s375 = sand.u32 %s29, 1
        %s376 = scalar_lea.sflag [#allocation6], %s375
        %s377 = sand.u32 %s63, 1
        %s378 = smul.addr %s377, 8
        %s379 = scalar_lea.vmem [#allocation5], %s378
        %p380 = pneg %p76
        %p381 = pneg %p73
        %p382 = pneg %p97
        %p383 = pneg %p94
        %p384 = pneg %p118
        %p385 = pneg %p115
        %p386 = pneg %p139
        %p387 = pneg %p136
        %p388 = pneg %p160
        %p389 = pneg %p157
        %p390 = pneg %p181
        %p391 = pneg %p178
        %p392 = pneg %p202
        %p393 = pneg %p199
        %p394 = pneg %p228
        %p395 = pneg %p225
        %s396 = sand.u32 %s215, 1
        %s397 = scalar_lea.sflag [#allocation4], %s396
        %s398 = sand.u32 %s215, 1
        %s399 = smul.addr %s398, 8
        %s400 = scalar_lea.vmem [#allocation11], %s399
        %v402 = vld [vmem:[%s342] sm:$0xff]
        %v403 = vpack.c.bf16 %v402, %v402
        %v404 = vld [vmem:[%s351] sm:$0xff]
        %v405 = vpack.c.bf16 %v404, %v404
        %v406 = vld [vmem:[#allocation7] sm:$0xf]
        %v407 = vld [vmem:[#allocation7 + $0x4] sm:$0xf]
        %v408 = vld [vmem:[#allocation7 + $0x8] sm:$0xf]
        %v409 = vld [vmem:[#allocation7 + $0xc] sm:$0xf]
        %v410 = vld [vmem:[%s5] sm:$0x1]
        %v412 = vlaneseq
        %v413 = vshrl.u32 %v412, 7
        %v414 = vsub.s32 0, %v413
        %v415 = vrot.slane %v410, %v414
        %v421 = vunpack.c.l.b16 %v406
        %v422 = vunpack.c.l.b16 %v407
        %v423 = vunpack.c.l.b16 %v408
        %v424 = vunpack.c.l.b16 %v409
        %v425 = vpack.c.b16 %v422, %v421
        %v426 = vpack.c.b16 %v424, %v423
        %vm429 = vcmask 261120
        %v431 = vsel %vm429, %v403, 0
        %433 = vmatprep.subr.bf16.mxu0 0
        %434 = vmatpush1.bf16.msra.mxu0 %v425
        %435 = vmatprep.subr.bf16.mxu0 0
        %436 = vmatpush1.bf16.msra.mxu0 %v426
        %437 = vmatprep.subr.bf16.mxu0 0
        %438 = vmatpush1.bf16.msra.mxu0 0
        %439 = vmatprep.subr.bf16.mxu0 0
        %440 = vmatpush1.bf16.msra.mxu0 0
        %441 = vmatprep.subr.bf16.mxu0 0
        %442 = vmatpush1.bf16.msra.mxu0 0
        %443 = vmatprep.subr.bf16.mxu0 0
        %444 = vmatpush1.bf16.msra.mxu0 0
        %445 = vmatprep.subr.bf16.mxu0 0
        %446 = vmatpush1.bf16.msra.mxu0 0
        %447 = vmatprep.subr.bf16.mxu0 0
        %448 = vmatpush1.bf16.msra.mxu0 0
        %449 = vmatprep.subr.bf16.mxu0 0
        %450 = vmatpush1.bf16.msra.mxu0 0
        %451 = vmatprep.subr.bf16.mxu0 0
        %452 = vmatpush1.bf16.msra.mxu0 0
        %453 = vmatprep.subr.bf16.mxu0 0
        %454 = vmatpush1.bf16.msra.mxu0 0
        %455 = vmatprep.subr.bf16.mxu0 0
        %456 = vmatpush1.bf16.msra.mxu0 0
        %457 = vmatprep.subr.bf16.mxu0 0
        %458 = vmatpush1.bf16.msra.mxu0 0
        %459 = vmatprep.subr.bf16.mxu0 0
        %460 = vmatpush1.bf16.msra.mxu0 0
        %461 = vmatprep.subr.bf16.mxu0 0
        %462 = vmatpush1.bf16.msra.mxu0 0
        %463 = vmatprep.subr.bf16.mxu0 0
        %464 = vmatpush1.bf16.msra.mxu0 0
        %465 = vmatprep.mubr.bf16.mxu0 0
        %466 = vmatmul.mubr.bf16.gmra.mrb[0].mxu0 %v431
        %v467 = vpop.f32.mrb[0].mxu0
        %v468 = vadd.f32 %v415, %v467
        %v469 = vpop.f32.mrb[0].mxu0
        %v470 = vpop.f32.mrb[0].mxu0
        %v471 = vpop.f32.mrb[0].mxu0
        %472 = vdwg.mxu0
        %v473 = vld [vmem:[#allocation8] sm:$0xf]
        %v474 = vld [vmem:[#allocation8 + $0x4] sm:$0xf]
        %v475 = vld [vmem:[#allocation8 + $0x8] sm:$0xf]
        %v476 = vld [vmem:[#allocation8 + $0xc] sm:$0xf]
        %v481 = vunpack.c.l.b16 %v473
        %v482 = vunpack.c.l.b16 %v474
        %v483 = vunpack.c.l.b16 %v475
        %v484 = vunpack.c.l.b16 %v476
        %v485 = vpack.c.b16 %v482, %v481
        %v486 = vpack.c.b16 %v484, %v483
        %v490 = vsel %vm429, %v405, 0
        %492 = vmatprep.subr.bf16.mxu0 0
        %493 = vmatpush1.bf16.msra.mxu0 %v485
        %494 = vmatprep.subr.bf16.mxu0 0
        %495 = vmatpush1.bf16.msra.mxu0 %v486
        %496 = vmatprep.subr.bf16.mxu0 0
        %497 = vmatpush1.bf16.msra.mxu0 0
        %498 = vmatprep.subr.bf16.mxu0 0
        %499 = vmatpush1.bf16.msra.mxu0 0
        %500 = vmatprep.subr.bf16.mxu0 0
        %501 = vmatpush1.bf16.msra.mxu0 0
        %502 = vmatprep.subr.bf16.mxu0 0
        %503 = vmatpush1.bf16.msra.mxu0 0
        %504 = vmatprep.subr.bf16.mxu0 0
        %505 = vmatpush1.bf16.msra.mxu0 0
        %506 = vmatprep.subr.bf16.mxu0 0
        %507 = vmatpush1.bf16.msra.mxu0 0
        %508 = vmatprep.subr.bf16.mxu0 0
        %509 = vmatpush1.bf16.msra.mxu0 0
        %510 = vmatprep.subr.bf16.mxu0 0
        %511 = vmatpush1.bf16.msra.mxu0 0
        %512 = vmatprep.subr.bf16.mxu0 0
        %513 = vmatpush1.bf16.msra.mxu0 0
        %514 = vmatprep.subr.bf16.mxu0 0
        %515 = vmatpush1.bf16.msra.mxu0 0
        %516 = vmatprep.subr.bf16.mxu0 0
        %517 = vmatpush1.bf16.msra.mxu0 0
        %518 = vmatprep.subr.bf16.mxu0 0
        %519 = vmatpush1.bf16.msra.mxu0 0
        %520 = vmatprep.subr.bf16.mxu0 0
        %521 = vmatpush1.bf16.msra.mxu0 0
        %522 = vmatprep.subr.bf16.mxu0 0
        %523 = vmatpush1.bf16.msra.mxu0 0
        %524 = vmatprep.mubr.bf16.mxu0 0
        %525 = vmatmul.mubr.bf16.gmra.mrb[0].mxu0 %v490
        %v526 = vpop.f32.mrb[0].mxu0
        %v527 = vadd.f32 0.0, %v526
        %v528 = vpop.f32.mrb[0].mxu0
        %v529 = vpop.f32.mrb[0].mxu0
        %v530 = vpop.f32.mrb[0].mxu0
        %531 = vdwg.mxu0
        %v532 = vld [vmem:[%s6] sm:$0x1]
        %v534 = vlaneseq
        %v535 = vshrl.u32 %v534, 7
        %v536 = vsub.s32 0, %v535
        %v537 = vrot.slane %v532, %v536
        %538 = vrot.lane.b32.xlu0 %v537, 32
        %v539 = vpop.permute.xlu0 %538
        %v541 = vadd.f32 %v527, %v539
        %v542 = vpack.c.bf16 %v468, %v468
        %v543 = vpack.c.bf16 %v527, %v527
        %v544 = vpack.c.bf16 %v541, %v541
        %vm545 = vcmask 64512
        %v547 = vsel %vm545, %v542, 0
        %v550 = vsel %vm545, %v543, 0
        %552 = vmatprep.subr.bf16.mxu0 0
        %553 = vmatpush1.bf16.xpose.msra.mxu0 %v550
        %554 = vmatprep.subr.bf16.mxu0 0
        %555 = vmatpush1.bf16.xpose.msra.mxu0 0
        %556 = vmatprep.subr.bf16.mxu0 0
        %557 = vmatpush1.bf16.xpose.msra.mxu0 0
        %558 = vmatprep.subr.bf16.mxu0 0
        %559 = vmatpush1.bf16.xpose.msra.mxu0 0
        %560 = vmatprep.subr.bf16.mxu0 0
        %561 = vmatpush1.bf16.xpose.msra.mxu0 0
        %562 = vmatprep.subr.bf16.mxu0 0
        %563 = vmatpush1.bf16.xpose.msra.mxu0 0
        %564 = vmatprep.subr.bf16.mxu0 0
        %565 = vmatpush1.bf16.xpose.msra.mxu0 0
        %566 = vmatprep.subr.bf16.mxu0 0
        %567 = vmatpush1.bf16.xpose.msra.mxu0 0
        %568 = vmatprep.subr.bf16.mxu0 0
        %569 = vmatpush1.bf16.xpose.msra.mxu0 0
        %570 = vmatprep.subr.bf16.mxu0 0
        %571 = vmatpush1.bf16.xpose.msra.mxu0 0
        %572 = vmatprep.subr.bf16.mxu0 0
        %573 = vmatpush1.bf16.xpose.msra.mxu0 0
        %574 = vmatprep.subr.bf16.mxu0 0
        %575 = vmatpush1.bf16.xpose.msra.mxu0 0
        %576 = vmatprep.subr.bf16.mxu0 0
        %577 = vmatpush1.bf16.xpose.msra.mxu0 0
        %578 = vmatprep.subr.bf16.mxu0 0
        %579 = vmatpush1.bf16.xpose.msra.mxu0 0
        %580 = vmatprep.subr.bf16.mxu0 0
        %581 = vmatpush1.bf16.xpose.msra.mxu0 0
        %582 = vmatprep.subr.bf16.mxu0 0
        %583 = vmatpush1.bf16.xpose.msra.mxu0 0
        %584 = vmatprep.mubr.bf16.mxu0 0
        %585 = vmatmul.mubr.bf16.gmra.mrb[0].mxu0 %v547
        %v586 = vpop.f32.mrb[0].mxu0
        %v587 = vadd.f32 0.0, %v586
        %v588 = vpop.f32.mrb[0].mxu0
        %v589 = vpop.f32.mrb[0].mxu0
        %v590 = vpop.f32.mrb[0].mxu0
        %591 = vdwg.mxu0
        %v592 = vsel %vm545, %v587, -inf
        %593 = vmax.xlane.f32.xlu0 %v592
        %v594 = vpop.xlane.xlu0 %593
        %v595 = vsub.f32 %v587, %v594
        %v596 = vmul.f32 %v595, 1.442695
        %v597 = vpow.pop %v596
        %v598 = vsel %vm545, %v597, 0.0
        %599 = vadd.xlane.f32.xlu0 %v598
        %v600 = vpop.xlane.xlu0 %599
        %v601 = vrcp.pop %v600
        %v602 = vmul.f32 %v597, %v601
        %v603 = vpack.c.bf16 %v602, %v602
        %605 = vrot.lane.b32.xlu0 %v544, 96
        %v606 = vpop.permute.xlu0 %605
        %v608 = vsel %vm545, %v603, 0
        %vm610 = vcmask 1043456
        %v612 = vsel %vm610, %v606, 0
        %614 = vmatprep.subr.bf16.mxu0 0
        %615 = vmatpush1.bf16.msra.mxu0 %v612
        %616 = vmatprep.subr.bf16.mxu0 0
        %617 = vmatpush1.bf16.msra.mxu0 0
        %618 = vmatprep.subr.bf16.mxu0 0
        %619 = vmatpush1.bf16.msra.mxu0 0
        %620 = vmatprep.subr.bf16.mxu0 0
        %621 = vmatpush1.bf16.msra.mxu0 0
        %622 = vmatprep.subr.bf16.mxu0 0
        %623 = vmatpush1.bf16.msra.mxu0 0
        %624 = vmatprep.subr.bf16.mxu0 0
        %625 = vmatpush1.bf16.msra.mxu0 0
        %626 = vmatprep.subr.bf16.mxu0 0
        %627 = vmatpush1.bf16.msra.mxu0 0
        %628 = vmatprep.subr.bf16.mxu0 0
        %629 = vmatpush1.bf16.msra.mxu0 0
        %630 = vmatprep.subr.bf16.mxu0 0
        %631 = vmatpush1.bf16.msra.mxu0 0
        %632 = vmatprep.subr.bf16.mxu0 0
        %633 = vmatpush1.bf16.msra.mxu0 0
        %634 = vmatprep.subr.bf16.mxu0 0
        %635 = vmatpush1.bf16.msra.mxu0 0
        %636 = vmatprep.subr.bf16.mxu0 0
        %637 = vmatpush1.bf16.msra.mxu0 0
        %638 = vmatprep.subr.bf16.mxu0 0
        %639 = vmatpush1.bf16.msra.mxu0 0
        %640 = vmatprep.subr.bf16.mxu0 0
        %641 = vmatpush1.bf16.msra.mxu0 0
        %642 = vmatprep.subr.bf16.mxu0 0
        %643 = vmatpush1.bf16.msra.mxu0 0
        %644 = vmatprep.subr.bf16.mxu0 0
        %645 = vmatpush1.bf16.msra.mxu0 0
        %646 = vmatprep.mubr.bf16.mxu0 0
        %647 = vmatmul.mubr.bf16.gmra.mrb[0].mxu0 %v608
        %v648 = vpop.f32.mrb[0].mxu0
        %v649 = vadd.f32 0.0, %v648
        %v650 = vpop.f32.mrb[0].mxu0
        %v651 = vpop.f32.mrb[0].mxu0
        %v652 = vpop.f32.mrb[0].mxu0
        %653 = vdwg.mxu0
        %655 = vrot.lane.b32.xlu0 %v542, 120
        %v656 = vpop.permute.xlu0 %655
        %658 = vrot.lane.b32.xlu0 %v543, 120
        %v659 = vpop.permute.xlu0 %658
        %v661 = vsel %vm545, %v656, 0
        %v664 = vsel %vm545, %v659, 0
        %666 = vmatprep.subr.bf16.mxu0 0
        %667 = vmatpush1.bf16.xpose.msra.mxu0 %v664
        %668 = vmatprep.subr.bf16.mxu0 0
        %669 = vmatpush1.bf16.xpose.msra.mxu0 0
        %670 = vmatprep.subr.bf16.mxu0 0
        %671 = vmatpush1.bf16.xpose.msra.mxu0 0
        %672 = vmatprep.subr.bf16.mxu0 0
        %673 = vmatpush1.bf16.xpose.msra.mxu0 0
        %674 = vmatprep.subr.bf16.mxu0 0
        %675 = vmatpush1.bf16.xpose.msra.mxu0 0
        %676 = vmatprep.subr.bf16.mxu0 0
        %677 = vmatpush1.bf16.xpose.msra.mxu0 0
        %678 = vmatprep.subr.bf16.mxu0 0
        %679 = vmatpush1.bf16.xpose.msra.mxu0 0
        %680 = vmatprep.subr.bf16.mxu0 0
        %681 = vmatpush1.bf16.xpose.msra.mxu0 0
        %682 = vmatprep.subr.bf16.mxu0 0
        %683 = vmatpush1.bf16.xpose.msra.mxu0 0
        %684 = vmatprep.subr.bf16.mxu0 0
        %685 = vmatpush1.bf16.xpose.msra.mxu0 0
        %686 = vmatprep.subr.bf16.mxu0 0
        %687 = vmatpush1.bf16.xpose.msra.mxu0 0
        %688 = vmatprep.subr.bf16.mxu0 0
        %689 = vmatpush1.bf16.xpose.msra.mxu0 0
        %690 = vmatprep.subr.bf16.mxu0 0
        %691 = vmatpush1.bf16.xpose.msra.mxu0 0
        %692 = vmatprep.subr.bf16.mxu0 0
        %693 = vmatpush1.bf16.xpose.msra.mxu0 0
        %694 = vmatprep.subr.bf16.mxu0 0
        %695 = vmatpush1.bf16.xpose.msra.mxu0 0
        %696 = vmatprep.subr.bf16.mxu0 0
        %697 = vmatpush1.bf16.xpose.msra.mxu0 0
        %698 = vmatprep.mubr.bf16.mxu0 0
        %699 = vmatmul.mubr.bf16.gmra.mrb[0].mxu0 %v661
        %v700 = vpop.f32.mrb[0].mxu0
        %v701 = vadd.f32 0.0, %v700
        %v702 = vpop.f32.mrb[0].mxu0
        %v703 = vpop.f32.mrb[0].mxu0
        %v704 = vpop.f32.mrb[0].mxu0
        %705 = vdwg.mxu0
        %v706 = vsel %vm545, %v701, -inf
        %707 = vmax.xlane.f32.xlu0 %v706
        %v708 = vpop.xlane.xlu0 %707
        %v709 = vsub.f32 %v701, %v708
        %v710 = vmul.f32 %v709, 1.442695
        %v711 = vpow.pop %v710
        %v712 = vsel %vm545, %v711, 0.0
        %713 = vadd.xlane.f32.xlu0 %v712
        %v714 = vpop.xlane.xlu0 %713
        %v715 = vrcp.pop %v714
        %v716 = vmul.f32 %v711, %v715
        %v717 = vpack.c.bf16 %v716, %v716
        %718 = vrot.lane.b32.xlu0 %v544, 88
        %v719 = vpop.permute.xlu0 %718
        %v721 = vsel %vm545, %v717, 0
        %v724 = vsel %vm610, %v719, 0
        %726 = vmatprep.subr.bf16.mxu0 0
        %727 = vmatpush1.bf16.msra.mxu0 %v724
        %728 = vmatprep.subr.bf16.mxu0 0
        %729 = vmatpush1.bf16.msra.mxu0 0
        %730 = vmatprep.subr.bf16.mxu0 0
        %731 = vmatpush1.bf16.msra.mxu0 0
        %732 = vmatprep.subr.bf16.mxu0 0
        %733 = vmatpush1.bf16.msra.mxu0 0
        %734 = vmatprep.subr.bf16.mxu0 0
        %735 = vmatpush1.bf16.msra.mxu0 0
        %736 = vmatprep.subr.bf16.mxu0 0
        %737 = vmatpush1.bf16.msra.mxu0 0
        %738 = vmatprep.subr.bf16.mxu0 0
        %739 = vmatpush1.bf16.msra.mxu0 0
        %740 = vmatprep.subr.bf16.mxu0 0
        %741 = vmatpush1.bf16.msra.mxu0 0
        %742 = vmatprep.subr.bf16.mxu0 0
        %743 = vmatpush1.bf16.msra.mxu0 0
        %744 = vmatprep.subr.bf16.mxu0 0
        %745 = vmatpush1.bf16.msra.mxu0 0
        %746 = vmatprep.subr.bf16.mxu0 0
        %747 = vmatpush1.bf16.msra.mxu0 0
        %748 = vmatprep.subr.bf16.mxu0 0
        %749 = vmatpush1.bf16.msra.mxu0 0
        %750 = vmatprep.subr.bf16.mxu0 0
        %751 = vmatpush1.bf16.msra.mxu0 0
        %752 = vmatprep.subr.bf16.mxu0 0
        %753 = vmatpush1.bf16.msra.mxu0 0
        %754 = vmatprep.subr.bf16.mxu0 0
        %755 = vmatpush1.bf16.msra.mxu0 0
        %756 = vmatprep.subr.bf16.mxu0 0
        %757 = vmatpush1.bf16.msra.mxu0 0
        %758 = vmatprep.mubr.bf16.mxu0 0
        %759 = vmatmul.mubr.bf16.gmra.mrb[0].mxu0 %v721
        %v760 = vpop.f32.mrb[0].mxu0
        %v761 = vadd.f32 0.0, %v760
        %v762 = vpop.f32.mrb[0].mxu0
        %v763 = vpop.f32.mrb[0].mxu0
        %v764 = vpop.f32.mrb[0].mxu0
        %765 = vdwg.mxu0
        %766 = vrot.lane.b32.xlu0 %v542, 112
        %v767 = vpop.permute.xlu0 %766
        %768 = vrot.lane.b32.xlu0 %v543, 112
        %v769 = vpop.permute.xlu0 %768
        %v771 = vsel %vm545, %v767, 0
        %v774 = vsel %vm545, %v769, 0
        %776 = vmatprep.subr.bf16.mxu0 0
        %777 = vmatpush1.bf16.xpose.msra.mxu0 %v774
        %778 = vmatprep.subr.bf16.mxu0 0
        %779 = vmatpush1.bf16.xpose.msra.mxu0 0
        %780 = vmatprep.subr.bf16.mxu0 0
        %781 = vmatpush1.bf16.xpose.msra.mxu0 0
        %782 = vmatprep.subr.bf16.mxu0 0
        %783 = vmatpush1.bf16.xpose.msra.mxu0 0
        %784 = vmatprep.subr.bf16.mxu0 0
        %785 = vmatpush1.bf16.xpose.msra.mxu0 0
        %786 = vmatprep.subr.bf16.mxu0 0
        %787 = vmatpush1.bf16.xpose.msra.mxu0 0
        %788 = vmatprep.subr.bf16.mxu0 0
        %789 = vmatpush1.bf16.xpose.msra.mxu0 0
        %790 = vmatprep.subr.bf16.mxu0 0
        %791 = vmatpush1.bf16.xpose.msra.mxu0 0
        %792 = vmatprep.subr.bf16.mxu0 0
        %793 = vmatpush1.bf16.xpose.msra.mxu0 0
        %794 = vmatprep.subr.bf16.mxu0 0
        %795 = vmatpush1.bf16.xpose.msra.mxu0 0
        %796 = vmatprep.subr.bf16.mxu0 0
        %797 = vmatpush1.bf16.xpose.msra.mxu0 0
        %798 = vmatprep.subr.bf16.mxu0 0
        %799 = vmatpush1.bf16.xpose.msra.mxu0 0
        %800 = vmatprep.subr.bf16.mxu0 0
        %801 = vmatpush1.bf16.xpose.msra.mxu0 0
        %802 = vmatprep.subr.bf16.mxu0 0
        %803 = vmatpush1.bf16.xpose.msra.mxu0 0
        %804 = vmatprep.subr.bf16.mxu0 0
        %805 = vmatpush1.bf16.xpose.msra.mxu0 0
        %806 = vmatprep.subr.bf16.mxu0 0
        %807 = vmatpush1.bf16.xpose.msra.mxu0 0
        %808 = vmatprep.mubr.bf16.mxu0 0
        %809 = vmatmul.mubr.bf16.gmra.mrb[0].mxu0 %v771
        %v810 = vpop.f32.mrb[0].mxu0
        %v811 = vadd.f32 0.0, %v810
        %v812 = vpop.f32.mrb[0].mxu0
        %v813 = vpop.f32.mrb[0].mxu0
        %v814 = vpop.f32.mrb[0].mxu0
        %815 = vdwg.mxu0
        %v816 = vsel %vm545, %v811, -inf
        %817 = vmax.xlane.f32.xlu0 %v816
        %v818 = vpop.xlane.xlu0 %817
        %v819 = vsub.f32 %v811, %v818
        %v820 = vmul.f32 %v819, 1.442695
        %v821 = vpow.pop %v820
        %v822 = vsel %vm545, %v821, 0.0
        %823 = vadd.xlane.f32.xlu0 %v822
        %v824 = vpop.xlane.xlu0 %823
        %v825 = vrcp.pop %v824
        %v826 = vmul.f32 %v821, %v825
        %v827 = vpack.c.bf16 %v826, %v826
        %828 = vrot.lane.b32.xlu0 %v544, 80
        %v829 = vpop.permute.xlu0 %828
        %v831 = vsel %vm545, %v827, 0
        %v834 = vsel %vm610, %v829, 0
        %836 = vmatprep.subr.bf16.mxu0 0
        %837 = vmatpush1.bf16.msra.mxu0 %v834
        %838 = vmatprep.subr.bf16.mxu0 0
        %839 = vmatpush1.bf16.msra.mxu0 0
        %840 = vmatprep.subr.bf16.mxu0 0
        %841 = vmatpush1.bf16.msra.mxu0 0
        %842 = vmatprep.subr.bf16.mxu0 0
        %843 = vmatpush1.bf16.msra.mxu0 0
        %844 = vmatprep.subr.bf16.mxu0 0
        %845 = vmatpush1.bf16.msra.mxu0 0
        %846 = vmatprep.subr.bf16.mxu0 0
        %847 = vmatpush1.bf16.msra.mxu0 0
        %848 = vmatprep.subr.bf16.mxu0 0
        %849 = vmatpush1.bf16.msra.mxu0 0
        %850 = vmatprep.subr.bf16.mxu0 0
        %851 = vmatpush1.bf16.msra.mxu0 0
        %852 = vmatprep.subr.bf16.mxu0 0
        %853 = vmatpush1.bf16.msra.mxu0 0
        %854 = vmatprep.subr.bf16.mxu0 0
        %855 = vmatpush1.bf16.msra.mxu0 0
        %856 = vmatprep.subr.bf16.mxu0 0
        %857 = vmatpush1.bf16.msra.mxu0 0
        %858 = vmatprep.subr.bf16.mxu0 0
        %859 = vmatpush1.bf16.msra.mxu0 0
        %860 = vmatprep.subr.bf16.mxu0 0
        %861 = vmatpush1.bf16.msra.mxu0 0
        %862 = vmatprep.subr.bf16.mxu0 0
        %863 = vmatpush1.bf16.msra.mxu0 0
        %864 = vmatprep.subr.bf16.mxu0 0
        %865 = vmatpush1.bf16.msra.mxu0 0
        %866 = vmatprep.subr.bf16.mxu0 0
        %867 = vmatpush1.bf16.msra.mxu0 0
        %868 = vmatprep.mubr.bf16.mxu0 0
        %869 = vmatmul.mubr.bf16.gmra.mrb[0].mxu0 %v831
        %v870 = vpop.f32.mrb[0].mxu0
        %v871 = vadd.f32 0.0, %v870
        %v872 = vpop.f32.mrb[0].mxu0
        %v873 = vpop.f32.mrb[0].mxu0
        %v874 = vpop.f32.mrb[0].mxu0
        %875 = vdwg.mxu0
        %876 = vrot.lane.b32.xlu0 %v542, 104
        %v877 = vpop.permute.xlu0 %876
        %878 = vrot.lane.b32.xlu0 %v543, 104
        %v879 = vpop.permute.xlu0 %878
        %v881 = vsel %vm545, %v877, 0
        %v884 = vsel %vm545, %v879, 0
        %886 = vmatprep.subr.bf16.mxu0 0
        %887 = vmatpush1.bf16.xpose.msra.mxu0 %v884
        %888 = vmatprep.subr.bf16.mxu0 0
        %889 = vmatpush1.bf16.xpose.msra.mxu0 0
        %890 = vmatprep.subr.bf16.mxu0 0
        %891 = vmatpush1.bf16.xpose.msra.mxu0 0
        %892 = vmatprep.subr.bf16.mxu0 0
        %893 = vmatpush1.bf16.xpose.msra.mxu0 0
        %894 = vmatprep.subr.bf16.mxu0 0
        %895 = vmatpush1.bf16.xpose.msra.mxu0 0
        %896 = vmatprep.subr.bf16.mxu0 0
        %897 = vmatpush1.bf16.xpose.msra.mxu0 0
        %898 = vmatprep.subr.bf16.mxu0 0
        %899 = vmatpush1.bf16.xpose.msra.mxu0 0
        %900 = vmatprep.subr.bf16.mxu0 0
        %901 = vmatpush1.bf16.xpose.msra.mxu0 0
        %902 = vmatprep.subr.bf16.mxu0 0
        %903 = vmatpush1.bf16.xpose.msra.mxu0 0
        %904 = vmatprep.subr.bf16.mxu0 0
        %905 = vmatpush1.bf16.xpose.msra.mxu0 0
        %906 = vmatprep.subr.bf16.mxu0 0
        %907 = vmatpush1.bf16.xpose.msra.mxu0 0
        %908 = vmatprep.subr.bf16.mxu0 0
        %909 = vmatpush1.bf16.xpose.msra.mxu0 0
        %910 = vmatprep.subr.bf16.mxu0 0
        %911 = vmatpush1.bf16.xpose.msra.mxu0 0
        %912 = vmatprep.subr.bf16.mxu0 0
        %913 = vmatpush1.bf16.xpose.msra.mxu0 0
        %914 = vmatprep.subr.bf16.mxu0 0
        %915 = vmatpush1.bf16.xpose.msra.mxu0 0
        %916 = vmatprep.subr.bf16.mxu0 0
        %917 = vmatpush1.bf16.xpose.msra.mxu0 0
        %918 = vmatprep.mubr.bf16.mxu0 0
        %919 = vmatmul.mubr.bf16.gmra.mrb[0].mxu0 %v881
        %v920 = vpop.f32.mrb[0].mxu0
        %v921 = vadd.f32 0.0, %v920
        %v922 = vpop.f32.mrb[0].mxu0
        %v923 = vpop.f32.mrb[0].mxu0
        %v924 = vpop.f32.mrb[0].mxu0
        %925 = vdwg.mxu0
        %v926 = vsel %vm545, %v921, -inf
        %927 = vmax.xlane.f32.xlu0 %v926
        %v928 = vpop.xlane.xlu0 %927
        %v929 = vsub.f32 %v921, %v928
        %v930 = vmul.f32 %v929, 1.442695
        %v931 = vpow.pop %v930
        %v932 = vsel %vm545, %v931, 0.0
        %933 = vadd.xlane.f32.xlu0 %v932
        %v934 = vpop.xlane.xlu0 %933
        %v935 = vrcp.pop %v934
        %v936 = vmul.f32 %v931, %v935
        %v937 = vpack.c.bf16 %v936, %v936
        %938 = vrot.lane.b32.xlu0 %v544, 72
        %v939 = vpop.permute.xlu0 %938
        %v941 = vsel %vm545, %v937, 0
        %v944 = vsel %vm610, %v939, 0
        %946 = vmatprep.subr.bf16.mxu0 0
        %947 = vmatpush1.bf16.msra.mxu0 %v944
        %948 = vmatprep.subr.bf16.mxu0 0
        %949 = vmatpush1.bf16.msra.mxu0 0
        %950 = vmatprep.subr.bf16.mxu0 0
        %951 = vmatpush1.bf16.msra.mxu0 0
        %952 = vmatprep.subr.bf16.mxu0 0
        %953 = vmatpush1.bf16.msra.mxu0 0
        %954 = vmatprep.subr.bf16.mxu0 0
        %955 = vmatpush1.bf16.msra.mxu0 0
        %956 = vmatprep.subr.bf16.mxu0 0
        %957 = vmatpush1.bf16.msra.mxu0 0
        %958 = vmatprep.subr.bf16.mxu0 0
        %959 = vmatpush1.bf16.msra.mxu0 0
        %960 = vmatprep.subr.bf16.mxu0 0
        %961 = vmatpush1.bf16.msra.mxu0 0
        %962 = vmatprep.subr.bf16.mxu0 0
        %963 = vmatpush1.bf16.msra.mxu0 0
        %964 = vmatprep.subr.bf16.mxu0 0
        %965 = vmatpush1.bf16.msra.mxu0 0
        %966 = vmatprep.subr.bf16.mxu0 0
        %967 = vmatpush1.bf16.msra.mxu0 0
        %968 = vmatprep.subr.bf16.mxu0 0
        %969 = vmatpush1.bf16.msra.mxu0 0
        %970 = vmatprep.subr.bf16.mxu0 0
        %971 = vmatpush1.bf16.msra.mxu0 0
        %972 = vmatprep.subr.bf16.mxu0 0
        %973 = vmatpush1.bf16.msra.mxu0 0
        %974 = vmatprep.subr.bf16.mxu0 0
        %975 = vmatpush1.bf16.msra.mxu0 0
        %976 = vmatprep.subr.bf16.mxu0 0
        %977 = vmatpush1.bf16.msra.mxu0 0
        %978 = vmatprep.mubr.bf16.mxu0 0
        %979 = vmatmul.mubr.bf16.gmra.mrb[0].mxu0 %v941
        %v980 = vpop.f32.mrb[0].mxu0
        %v981 = vadd.f32 0.0, %v980
        %v982 = vpop.f32.mrb[0].mxu0
        %v983 = vpop.f32.mrb[0].mxu0
        %v984 = vpop.f32.mrb[0].mxu0
        %985 = vdwg.mxu0
        %987 = vrot.lane.b32.xlu0 %v761, 8
        %v988 = vpop.permute.xlu0 %987
        %991 = vrot.lane.b32.xlu0 %v871, 16
        %v992 = vpop.permute.xlu0 %991
        %995 = vrot.lane.b32.xlu0 %v981, 24
        %v996 = vpop.permute.xlu0 %995
        %v998 = vsel %vm545, %v649, %v988
        %vm999 = vcmask 130048
        %v1000 = vsel %vm999, %v998, %v992
        %vm1001 = vcmask 195584
        %v1002 = vsel %vm1001, %v1000, %v996
        %v1003 = vpack.c.bf16 %v1002, %v1002
        %v1004 = vld [vmem:[#allocation10] sm:$0xf]
        %v1005 = vld [vmem:[#allocation10 + $0x4] sm:$0xf]
        %v1006 = vld [vmem:[#allocation10 + $0x8] sm:$0xf]
        %v1007 = vld [vmem:[#allocation10 + $0xc] sm:$0xf]
        %v1008 = vld [vmem:[%s7] sm:$0x1]
        %v1010 = vlaneseq
        %v1011 = vshrl.u32 %v1010, 7
        %v1012 = vsub.s32 0, %v1011
        %v1013 = vrot.slane %v1008, %v1012
        %v1019 = vunpack.c.l.b16 %v1004
        %v1020 = vunpack.c.l.b16 %v1005
        %v1021 = vunpack.c.l.b16 %v1006
        %v1022 = vunpack.c.l.b16 %v1007
        %v1023 = vpack.c.b16 %v1020, %v1019
        %v1024 = vpack.c.b16 %v1022, %v1021
        %v1028 = vsel %vm429, %v1003, 0
        %1030 = vmatprep.subr.bf16.mxu0 0
        %1031 = vmatpush1.bf16.msra.mxu0 %v1023
        %1032 = vmatprep.subr.bf16.mxu0 0
        %1033 = vmatpush1.bf16.msra.mxu0 %v1024
        %1034 = vmatprep.subr.bf16.mxu0 0
        %1035 = vmatpush1.bf16.msra.mxu0 0
        %1036 = vmatprep.subr.bf16.mxu0 0
        %1037 = vmatpush1.bf16.msra.mxu0 0
        %1038 = vmatprep.subr.bf16.mxu0 0
        %1039 = vmatpush1.bf16.msra.mxu0 0
        %1040 = vmatprep.subr.bf16.mxu0 0
        %1041 = vmatpush1.bf16.msra.mxu0 0
        %1042 = vmatprep.subr.bf16.mxu0 0
        %1043 = vmatpush1.bf16.msra.mxu0 0
        %1044 = vmatprep.subr.bf16.mxu0 0
        %1045 = vmatpush1.bf16.msra.mxu0 0
        %1046 = vmatprep.subr.bf16.mxu0 0
        %1047 = vmatpush1.bf16.msra.mxu0 0
        %1048 = vmatprep.subr.bf16.mxu0 0
        %1049 = vmatpush1.bf16.msra.mxu0 0
        %1050 = vmatprep.subr.bf16.mxu0 0
        %1051 = vmatpush1.bf16.msra.mxu0 0
        %1052 = vmatprep.subr.bf16.mxu0 0
        %1053 = vmatpush1.bf16.msra.mxu0 0
        %1054 = vmatprep.subr.bf16.mxu0 0
        %1055 = vmatpush1.bf16.msra.mxu0 0
        %1056 = vmatprep.subr.bf16.mxu0 0
        %1057 = vmatpush1.bf16.msra.mxu0 0
        %1058 = vmatprep.subr.bf16.mxu0 0
        %1059 = vmatpush1.bf16.msra.mxu0 0
        %1060 = vmatprep.subr.bf16.mxu0 0
        %1061 = vmatpush1.bf16.msra.mxu0 0
        %1062 = vmatprep.mubr.bf16.mxu0 0
        %1063 = vmatmul.mubr.bf16.gmra.mrb[0].mxu0 %v1028
        %v1064 = vpop.f32.mrb[0].mxu0
        %v1065 = vadd.f32 %v1013, %v1064
        %v1066 = vpop.f32.mrb[0].mxu0
        %v1067 = vpop.f32.mrb[0].mxu0
        %v1068 = vpop.f32.mrb[0].mxu0
        %1069 = vdwg.mxu0
        %1070 = vst.msk [vmem:[%s400] sm:$0xff] %vm429, %v1065
        %s1071 = sand.u32 %s215, 1
        %s1072 = scalar_lea.sflag [#allocation4], %s1071
        %s1073 = sand.u32 %s215, 1
        %s1074 = smul.addr %s1073, 8
        %s1075 = scalar_lea.vmem [#allocation11], %s1074
        // Predicated region
        $region73: #{tpu_custom_call.1} parent=51 // pred_check
          %p1076 = pneg %p225
        $region74: #{tpu_custom_call.1} parent=51 // pred_check_branch
          %1078 = sbr.rel (%p1076) target = $region76
        $region75: #{tpu_custom_call.1} parent=51 // pred_region
          %s1080 = ssub.s32 128, 128
          %1081 = vsyncadd %s1072, %s1080
          %s1082 = smul.addr %s29, 128
          %s1083 = scalar_lea.hbm %s8, %s1082
          %s1085 = sshll.u32 %s1075, 4
          %s1086 = int_to_ptr.vmem [resolvable:$true] %s1085
          %1088 = dma.vmem_to_hbm [thread:$0]  %s1086, 128, %s1083, %s1072
        $region76: #{tpu_custom_call.1} parent=51 // pred_fallthru
          _
      $region52: #{tpu_custom_call.1} parent=5 // pred_fallthru
        _
      %p1089 = scmp.le.s32.totalorder 2, %s24
      // Predicated region
      $region77: #{tpu_custom_call.1} parent=5 // pred_check
        %p1090 = pneg %p1089
      $region78: #{tpu_custom_call.1} parent=5 // pred_check_branch
        %1092 = sbr.rel (%p1090) target = $region80
      $region79: #{tpu_custom_call.1} parent=5 // pred_region
        %s1093 = ssub.s32 %s24, 2
        // Predicated region
        $region81: #{tpu_custom_call.1} parent=79 // pred_check
          %p1094 = pneg %p231
        $region82: #{tpu_custom_call.1} parent=79 // pred_check_branch
          %1096 = sbr.rel (%p1094) target = $region84
        $region83: #{tpu_custom_call.1} parent=79 // pred_region
          %s1097 = sand.u32 %s216, 1
          %s1098 = scalar_lea.sflag [#allocation4], %s1097
          %s1099 = sand.u32 %s216, 1
          %s1100 = smul.addr %s1099, 8
          %s1101 = scalar_lea.vmem [#allocation11], %s1100
          %1102 = dma.done %s1098, 128
        $region84: #{tpu_custom_call.1} parent=79 // pred_fallthru
          _
      $region80: #{tpu_custom_call.1} parent=5 // pred_fallthru
        _
    $region6: #{tpu_custom_call.1} parent=1 // loop_footer
      %s28 = sadd.s32 1, %s24
    $region7: #{tpu_custom_call.1} parent=1 // loop_footer_branch
      %23 = sbr.rel target = $region3
    $region8: #{tpu_custom_call.1} parent=1 // loop_exit
      _
    %1103 = vsyncpa [#allocation3], 1
    %s1104 = scalar_lea.sflag [#allocation3], 1
    %1105 = vsyncpa %s1104, 1
    %1106 = vsyncpa [#allocation6], 1
    %s1107 = scalar_lea.sflag [#allocation6], 1
    %1108 = vsyncpa %s1107, 1
    %1109 = vsyncpa [#allocation9], 1
    %1110 = vsyncpa [#allocation4], 1
    %s1111 = scalar_lea.sflag [#allocation4], 1
    %1112 = vsyncpa %s1111, 1

</llo_original>
